<compile_context>
chip_gen: v5e
topology: v5e:2x2
jax: 0.10.0
libtpu: 0.0.40
codegen_flags: <defaults>
</compile_context>

<pallas_src>
import functools

import jax
import jax.numpy as jnp
from jax.experimental import pallas as pl
from jax.experimental.pallas import tpu as pltpu


def _round_up(x, m):
    return ((x + m - 1) // m) * m


def _cdiv(a, b):
    return (a + b - 1) // b


def _vmem_capacity_bytes():
    """Generation-aware physical VMEM size (v5e/v6e: 128 MiB, v7x: 64 MiB)."""
    try:
        return int(pltpu.get_tpu_info().vmem_capacity_bytes)
    except Exception:
        return 64 * 1024 * 1024   # conservative fallback (v7x-sized)


def _choose_tile_n(n, c, itemsize):
    """Pick the batch tile size TN (rows), a multiple of 8.

    Two caps:
      * the logits tile itself targets ~4 MiB in the *input dtype* (bf16 gets
        twice the rows for the same DMA bytes) so the ~0.35 us per-grid-step
        overhead is amortized and the stream sits near the HBM roofline,
      * a generation-aware VMEM working-set model (~1/3 of physical VMEM):
        double-buffered input tiles plus a few f32 (TN, C) temporaries.
    TN is then rebalanced across the tiles so trailing batch padding is at
    most a handful of rows instead of up to TN-8 wasted rows.
    """
    vmem_budget = _vmem_capacity_bytes() // 3
    target_tile_bytes = 4 * 1024 * 1024
    tn_dma = target_tile_bytes // max(c * itemsize, 1)
    per_row_bytes = 2 * c * itemsize + 4 * c * 4   # 2x input bufs + f32 temps
    tn_vmem = vmem_budget // max(per_row_bytes, 1)
    tn = max(8, (min(tn_dma, tn_vmem) // 8) * 8)

    n_pad8 = _round_up(max(n, 1), 8)
    tn = min(tn, n_pad8)
    num_tiles = _cdiv(n_pad8, tn)
    # Rebalance: same tile count, minimal padding (<= 7 rows beyond the 8-pad).
    tn = _round_up(_cdiv(n_pad8, num_tiles), 8)
    return tn


def _ce_label_smooth_kernel(x_ref, t_ref, o_ref, *, one_minus_eps, eps_over_c,
                            n_valid, tile_n):
    # x_ref: (TN, C) logits tile (caller dtype), t_ref: (TN, 1) int32 targets,
    # o_ref: (1, 8, 128) lane-dense f32 per-tile partial loss (scalar bcast).
    x_raw = x_ref[...]                                       # (TN, C), caller dtype
    t = t_ref[...]                                           # (TN, 1), int32
    tn, c = x_raw.shape

    # Row max on the raw-dtype tile (bf16 keeps 2 rows/vreg for this pass);
    # cast to f32 exactly once afterwards.
    m = jnp.max(x_raw, axis=1, keepdims=True).astype(jnp.float32)    # (TN, 1)
    shifted = x_raw.astype(jnp.float32) - m                  # single (TN, C) f32 temp

    # Everything below is one traversal of `shifted`; the row max cancels out
    # of the final expression exactly (no row_sum - C*m cancellation):
    #   loss_row = lse - (1-eps)*(x[t]-m) - (eps/C)*sum_c(x-m)
    lse = jnp.log(jnp.sum(jnp.exp(shifted), axis=1, keepdims=True))  # (TN, 1)
    sum_shifted = jnp.sum(shifted, axis=1, keepdims=True)            # (TN, 1)
    classes = jax.lax.broadcasted_iota(jnp.int32, (tn, c), 1)
    s_t = jnp.sum(jnp.where(classes == t, shifted, 0.0),
                  axis=1, keepdims=True)                             # (TN, 1)
    # TODO(synk): on v7x, if bundle dumps show the XLU/VPU saturating, offload
    # the two sum-reductions to the idle MXU via jnp.dot(shifted, ones((C,128))).

    per_row = (lse
               - jnp.float32(one_minus_eps) * s_t
               - jnp.float32(eps_over_c) * sum_shifted)

    # Mask rows that are batch padding (global row index >= true N).
    row_ids = (pl.program_id(0) * tile_n
               + jax.lax.broadcasted_iota(jnp.int32, (tn, 1), 0))
    per_row = jnp.where(row_ids < n_valid, per_row, 0.0)

    partial = jnp.sum(per_row)
    # Lane-dense (8, 128) block: unmasked, full-width vector stores.
    o_ref[...] = jnp.full((1, 8, 128), partial, dtype=jnp.float32)


def cross_entropy_label_smooth(inputs, targets, epsilon=0.1):
    """JAX/Pallas equivalent of CrossEntropyLabelSmooth.forward."""
    n, c = inputs.shape
    itemsize = jnp.dtype(inputs.dtype).itemsize
    tn = _choose_tile_n(n, c, itemsize)
    num_tiles = _cdiv(_round_up(n, 8), tn)
    n_pad = num_tiles * tn

    x = inputs
    t2 = targets.astype(jnp.int32).reshape(n, 1)
    if n_pad != n:
        x = jnp.pad(x, ((0, n_pad - n), (0, 0)))
        t2 = jnp.pad(t2, ((0, n_pad - n), (0, 0)))   # class 0; rows masked in-kernel

    # Scoped VMEM limit from the modeled working set (+ margin), not a blanket
    # constant: keeps headroom on v7x (64 MiB) without capping v5e/v6e.
    ws = (2 * tn * c * itemsize      # double-buffered logits tiles
          + 2 * tn * 4               # double-buffered target tiles
          + 4 * tn * c * 4           # f32 in-kernel temporaries
          + 2 * 8 * 128 * 4)         # double-buffered output blocks
    vmem_limit = int(max(16 * 1024 * 1024,
                         min(_vmem_capacity_bytes() // 2,
                             2 * ws + 8 * 1024 * 1024)))

    # TODO(synk): for LLM-vocab-scale C (1e4-1e5), add an inner "arbitrary"
    # class-axis grid dim with (TN, TC) blocks and an online logsumexp carried
    # in VMEM scratch, finalized with pl.when on the last class tile.
    # TODO(synk): for C << 128 (e.g. the 32-class demo) pack 128//C rows per
    # vreg row in the wrapper (or fall back to plain XLA) to fill lanes.
    kernel = functools.partial(
        _ce_label_smooth_kernel,
        one_minus_eps=1.0 - float(epsilon),
        eps_over_c=float(epsilon) / c,
        n_valid=n, tile_n=tn)

    partials = pl.pallas_call(
        kernel,
        out_shape=jax.ShapeDtypeStruct((num_tiles, 8, 128), jnp.float32),
        grid=(num_tiles,),
        in_specs=[
            pl.BlockSpec((tn, c), lambda i: (i, 0)),   # logits tile
            pl.BlockSpec((tn, 1), lambda i: (i, 0)),   # targets tile
        ],
        out_specs=pl.BlockSpec((1, 8, 128), lambda i: (i, 0, 0)),
        compiler_params=pltpu.CompilerParams(
            # "parallel" batch-tile axis: shards across TensorCores on
            # multi-TC parts (v7x); harmless no-op on single-TC v5e/v6e.
            dimension_semantics=("parallel",),
            vmem_limit_bytes=vmem_limit,
        ),
    )(x, t2)

    # Each tile broadcast its masked partial into 8*128 lanes; sum the whole
    # array (no strided [:, 0, 0] gather) and fold the /1024 into the 1/N.
    return jnp.sum(partials) * (1.0 / (n * 8.0 * 128.0))


def _reference(inputs, targets, epsilon=0.1):
    n, c = inputs.shape
    log_probs = jax.nn.log_softmax(inputs.astype(jnp.float32), axis=1)
    onehot = jax.nn.one_hot(targets, c, dtype=jnp.float32)
    smooth = (1.0 - epsilon) * onehot + epsilon / c
    return jnp.sum(jnp.mean(-smooth * log_probs, axis=0))


if __name__ == "__main__":
    key = jax.random.PRNGKey(0)
    k1, k2, k3, k4 = jax.random.split(key, 4)

    # Small case (typical classifier use; no batch padding needed).
    batch, num_classes = 8, 32
    logits = jax.random.normal(k1, (batch, num_classes), dtype=jnp.float32)
    labels = jax.random.randint(k2, (batch,), 0, num_classes, dtype=jnp.int32)
    loss = jax.block_until_ready(cross_entropy_label_smooth(logits, labels, 0.1))
    ref = _reference(logits, labels, 0.1)
    assert jnp.allclose(loss, ref, atol=1e-4, rtol=1e-4), (loss, ref)

    # Case exercising batch padding + row masking (N not a multiple of 8).
    batch2, classes2 = 37, 128
    logits2 = 4.0 * jax.random.normal(k3, (batch2, classes2), dtype=jnp.float32)
    labels2 = jax.random.randint(k4, (batch2,), 0, classes2, dtype=jnp.int32)
    loss2 = jax.block_until_ready(cross_entropy_label_smooth(logits2, labels2, 0.1))
    ref2 = _reference(logits2, labels2, 0.1)
    assert jnp.allclose(loss2, ref2, atol=1e-4, rtol=1e-4), (loss2, ref2)

    print("KERNEL_OK")
</pallas_src>

<mosaic_0001>
module attributes {stable_mosaic.version = 11 : i64} {
  func.func @_ce_label_smooth_kernel(%arg0: i32, %arg1: memref<8x32xf32, #tpu.memory_space<vmem>>, %arg2: memref<8x1xi32, #tpu.memory_space<vmem>>, %arg3: memref<1x8x128xf32, #tpu.memory_space<vmem>>) attributes {dimension_semantics = [#tpu.dimension_semantics<parallel>], iteration_bounds = array<i64: 1>, scalar_prefetch = 0 : i64, scratch_operands = 0 : i64, tpu.core_type = #tpu.core_type<tc>, window_params = [{transform_indices = @transform_0, window_bounds = array<i64: 8, 32>}, {transform_indices = @transform_1, window_bounds = array<i64: 8, 1>}, {transform_indices = @transform_2, window_bounds = array<i64: 1, 8, 128>}]} {
    %c0 = arith.constant 0 : index
    %c0_0 = arith.constant 0 : index
    %0 = vector.load %arg1[%c0, %c0_0] : memref<8x32xf32, #tpu.memory_space<vmem>>, vector<8x32xf32>
    %c0_1 = arith.constant 0 : index
    %c0_2 = arith.constant 0 : index
    %1 = vector.load %arg2[%c0_1, %c0_2] : memref<8x1xi32, #tpu.memory_space<vmem>>, vector<8x1xi32>
    %cst = arith.constant dense<0xFF800000> : vector<8xf32>
    %2 = vector.multi_reduction <maximumf>, %0, %cst [1] : vector<8x32xf32> to vector<8xf32>
    %3 = vector.shape_cast %2 : vector<8xf32> to vector<8x1xf32>
    %4 = vector.broadcast %3 : vector<8x1xf32> to vector<8x32xf32>
    %5 = arith.subf %0, %4 : vector<8x32xf32>
    %6 = math.exp %5 : vector<8x32xf32>
    %cst_3 = arith.constant dense<0.000000e+00> : vector<8xf32>
    %7 = vector.multi_reduction <add>, %6, %cst_3 [1] : vector<8x32xf32> to vector<8xf32>
    %8 = vector.shape_cast %7 : vector<8xf32> to vector<8x1xf32>
    %9 = math.log %8 : vector<8x1xf32>
    %cst_4 = arith.constant dense<0.000000e+00> : vector<8xf32>
    %10 = vector.multi_reduction <add>, %5, %cst_4 [1] : vector<8x32xf32> to vector<8xf32>
    %11 = vector.shape_cast %10 : vector<8xf32> to vector<8x1xf32>
    %12 = tpu.iota {dimensions = array<i32: 1>} : vector<8x32xi32>
    %13 = vector.broadcast %1 : vector<8x1xi32> to vector<8x32xi32>
    %14 = arith.cmpi eq, %12, %13 : vector<8x32xi32>
    %cst_5 = arith.constant 0.000000e+00 : f32
    %15 = vector.broadcast %cst_5 : f32 to vector<8x32xf32>
    %16 = arith.select %14, %5, %15 : vector<8x32xi1>, vector<8x32xf32>
    %cst_6 = arith.constant dense<0.000000e+00> : vector<8xf32>
    %17 = vector.multi_reduction <add>, %16, %cst_6 [1] : vector<8x32xf32> to vector<8xf32>
    %18 = vector.shape_cast %17 : vector<8xf32> to vector<8x1xf32>
    %cst_7 = arith.constant 0.899999976 : f32
    %19 = vector.broadcast %cst_7 : f32 to vector<8x1xf32>
    %20 = arith.mulf %19, %18 : vector<8x1xf32>
    %21 = arith.subf %9, %20 : vector<8x1xf32>
    %cst_8 = arith.constant 3.125000e-03 : f32
    %22 = vector.broadcast %cst_8 : f32 to vector<8x1xf32>
    %23 = arith.mulf %22, %11 : vector<8x1xf32>
    %24 = arith.subf %21, %23 : vector<8x1xf32>
    %c8_i32 = arith.constant 8 : i32
    %25 = arith.muli %arg0, %c8_i32 : i32
    %26 = tpu.iota {dimensions = array<i32: 0>} : vector<8x1xi32>
    %27 = vector.broadcast %25 : i32 to vector<8x1xi32>
    %28 = arith.addi %27, %26 : vector<8x1xi32>
    %c8_i32_9 = arith.constant 8 : i32
    %29 = vector.broadcast %c8_i32_9 : i32 to vector<8x1xi32>
    %30 = arith.cmpi slt, %28, %29 : vector<8x1xi32>
    %cst_10 = arith.constant 0.000000e+00 : f32
    %31 = vector.broadcast %cst_10 : f32 to vector<8x1xf32>
    %32 = arith.select %30, %24, %31 : vector<8x1xi1>, vector<8x1xf32>
    %33 = vector.shape_cast %32 : vector<8x1xf32> to vector<1x8x1xf32>
    %cst_11 = arith.constant dense<0.000000e+00> : vector<1xf32>
    %34 = vector.multi_reduction <add>, %33, %cst_11 [1, 2] : vector<1x8x1xf32> to vector<1xf32>
    %35 = vector.shape_cast %34 : vector<1xf32> to vector<1x1x1xf32>
    %36 = vector.extract %35[0, 0, 0] : f32 from vector<1x1x1xf32>
    %37 = vector.broadcast %36 : f32 to vector<1x8x128xf32>
    %c0_12 = arith.constant 0 : index
    %c0_13 = arith.constant 0 : index
    %c0_14 = arith.constant 0 : index
    %38 = vector.load %arg3[%c0_12, %c0_13, %c0_14] : memref<1x8x128xf32, #tpu.memory_space<vmem>>, vector<1x8x128xf32>
    tpu.vector_store %arg3[%c0_12, %c0_13, %c0_14], %37 {strides = array<i32>} : memref<1x8x128xf32, #tpu.memory_space<vmem>>, vector<1x8x128xf32>,
    return
  }
  func.func @transform_0(%arg0: i32) -> (i32, i32) {
    %c0_i32 = arith.constant 0 : i32
    %c0_i32_0 = arith.constant 0 : i32
    return %arg0, %c0_i32 : i32, i32
  }
  func.func @transform_1(%arg0: i32) -> (i32, i32) {
    %c0_i32 = arith.constant 0 : i32
    %c0_i32_0 = arith.constant 0 : i32
    return %arg0, %c0_i32 : i32, i32
  }
  func.func @transform_2(%arg0: i32) -> (i32, i32, i32) {
    %c0_i32 = arith.constant 0 : i32
    %c0_i32_0 = arith.constant 0 : i32
    %c0_i32_1 = arith.constant 0 : i32
    return %arg0, %c0_i32, %c0_i32_0 : i32, i32, i32
  }
}

</mosaic_0001>

<llo_original>
// kernel: tpu_custom_call.1
$region0: #{tpu_custom_call.1}
  #allocation0 [shape = 'u32[]', space=smem, size = 0x4, offset = 0x4, fixed_abs, tag = 'smem constant byte address 0x4 - core index']
  #allocation1 [shape = 'u32[72,128]{1,0:T(1,128)}', space=vmem, size = 0x9000, scoped, tag = 'internal scratch']
  %s0 = inlined_call_operand.vmem [shape: f32[8,32], index: 0, kind: input, shape index: {}]
  %s1 = inlined_call_operand.vmem [shape: s32[8,1], index: 1, kind: input, shape index: {}]
  %s2 = inlined_call_operand.hbm [shape: f32[1,8,128], index: 2, kind: output, shape index: {}]
  %s3 = sld [smem:[#allocation0]]
  $region18: #{tpu_custom_call.1} parent=0
    _
  %s5 = ssub.s32 1, %s3
  %s6 = scalar_select 0, %s5, %s3
  $region1: #{tpu_custom_call.1} parent=0
    #allocation2 [shape = 'u8[4096]{0}', space=vmem, size = 0x1000, scoped, tag = 'output window, operand 0, single buffered']
    #allocation3 [shape = 's32[1]{0}', space=sflag, size = 0x4, scoped, tag = 'scoped memory for tpu_custom_call.1']
    %7 = vsyncpa [#allocation3], 0
    // Predicated region
    $region2: #{tpu_custom_call.1} parent=1 // pred_check
      _
    $region3: #{tpu_custom_call.1} parent=1 // pred_check_branch
      %9 = sbr.rel (0) target = $region5
    $region4: #{tpu_custom_call.1} parent=1 // pred_region
      _
    $region5: #{tpu_custom_call.1} parent=1 // pred_fallthru
      _
    // Predicated region
    $region6: #{tpu_custom_call.1} parent=1 // pred_check
      _
    $region7: #{tpu_custom_call.1} parent=1 // pred_check_branch
      %11 = sbr.rel (0) target = $region9
    $region8: #{tpu_custom_call.1} parent=1 // pred_region
      _
    $region9: #{tpu_custom_call.1} parent=1 // pred_fallthru
      _
    %v12 = vld [vmem:[%s0] sm:$0xff]
    %v13 = vld [vmem:[%s1] sm:$0xff]
    %vm14 = vcmask 261120
    %v15 = vsel %vm14, %v12, -inf
    %16 = vmax.xlane.f32.xlu0 %v15
    %v17 = vpop.xlane.xlu0 %16
    %v18 = vsub.f32 %v12, %v17
    %v19 = vmul.f32 %v18, 1.442695
    %v20 = vpow.pop %v19
    %v21 = vsel %vm14, %v20, 0.0
    %22 = vadd.xlane.f32.xlu0 %v21
    %v23 = vpop.xlane.xlu0 %22
    %v24 = vlog2.pop %v23
    %v25 = vmul.f32 %v24, 0.6931472
    %v26 = vsel %vm14, %v18, 0.0
    %27 = vadd.xlane.f32.xlu0 %v26
    %v28 = vpop.xlane.xlu0 %27
    %v29 = vlaneseq
    %v30 = vand.u32 %v29, 127
    %31 = vset.pattern.permute.xlu0 0
    %32 = vperm.xlu0 %31, %v13
    %v33 = vpop.permute.xlu0 %32
    %vm34 = vcmp.eq.s32.totalorder %v30, %v33
    %v35 = vsel %vm34, %v18, 0.0
    %v36 = vsel %vm14, %v35, 0.0
    %37 = vadd.xlane.f32.xlu0 %v36
    %v38 = vpop.xlane.xlu0 %37
    %v39 = vmul.f32 %v38, 0.9
    %v40 = vsub.f32 %v25, %v39
    %v41 = vmul.f32 %v28, 0.003125
    %v42 = vsub.f32 %v40, %v41
    %s43 = smul.u32 0, 8
    %v44 = vlaneseq
    %v45 = vshrl.u32 %v44, 7
    %v46 = vstv %s43
    %v47 = vadd.s32 %v46, %v45
    %vm48 = vcmp.lt.s32.totalorder %v47, 8
    %v49 = vsel %vm48, %v42, 0.0
    %vm50 = vcmask 7168
    %v51 = vsel %vm50, %v49, 0.0
    %52 = vadd.xlane.f32.xlu0 %v51
    %v53 = vpop.xlane.xlu0 %52
    %v54 = vrot.slane %v53, 4
    %v55 = vadd.f32 %v53, %v54
    %v56 = vrot.slane %v55, 2
    %v57 = vadd.f32 %v55, %v56
    %v58 = vrot.slane %v57, 1
    %v59 = vadd.f32 %v57, %v58
    %s60 = vtos %v59
    %v61 = vstv %s60
    %62 = vst [vmem:[#allocation2] sm:$0xff] %v61
    // Predicated region
    $region10: #{tpu_custom_call.1} parent=1 // pred_check
      _
    $region11: #{tpu_custom_call.1} parent=1 // pred_check_branch
      %64 = sbr.rel (0) target = $region13
    $region12: #{tpu_custom_call.1} parent=1 // pred_region
      %66 = vsyncadd [#allocation3], 0
      %s68 = sshll.u32 [#allocation2], 4
      %s69 = int_to_ptr.vmem [resolvable:$true] %s68
      %s70 = sshll.u32 %s2, 4
      %s71 = int_to_ptr.hbm [resolvable:$true] %s70
      %73 = dma.vmem_to_hbm [thread:$0]  %s69, 128, %s71, [#allocation3]
    $region13: #{tpu_custom_call.1} parent=1 // pred_fallthru
      _
    // Predicated region
    $region14: #{tpu_custom_call.1} parent=1 // pred_check
      _
    $region15: #{tpu_custom_call.1} parent=1 // pred_check_branch
      %75 = sbr.rel (0) target = $region17
    $region16: #{tpu_custom_call.1} parent=1 // pred_region
      %77 = dma.done [#allocation3], 128
    $region17: #{tpu_custom_call.1} parent=1 // pred_fallthru
      _
    %78 = vsyncpa [#allocation3], 1

</llo_original>
